<compile_context>
chip_gen: v7x
topology: tpu7x:2x2x1
jax: 0.10.0
libtpu: 0.0.40
codegen_flags: <defaults>
</compile_context>

<pallas_src>
import functools

import jax
import jax.numpy as jnp
from jax.experimental import pallas as pl
from jax.experimental.pallas import tpu as pltpu


def _round_up(n: int, m: int) -> int:
    return -(-n // m) * m


def _padded_tile_bytes(shape2d, dtype) -> int:
    """VMEM footprint of a 2-D tile after (sublane, lane) layout padding."""
    r, c = shape2d
    itemsize = jnp.dtype(dtype).itemsize
    sublane = max(8, 32 // itemsize)  # 8 for 4B, 16 for 2B, 32 for 1B dtypes
    return _round_up(r, sublane) * _round_up(c, 128) * itemsize


def _choose_seq_tile(S, E, D, dtype, seq_is_lane, budget_bytes) -> int:
    """Largest legal seq tile whose (double-buffered) blocks fit the budget."""

    def fits(st):
        xb = _padded_tile_bytes((E, st) if seq_is_lane else (st, E), dtype)
        ob = _padded_tile_bytes((st, D), dtype)
        wb = _padded_tile_bytes((E, D), dtype)
        return 2 * (xb + ob) + wb <= budget_bytes  # 2x-buffered x/out, 1x weight

    if fits(S):
        return S
    # BlockSpec (8,128) rule on the S axis: lane axis needs multiples of 128,
    # sublane axis multiples of 8 (unless the tile equals the full dim).
    step = 128 if seq_is_lane else 8
    st = (S // step) * step
    while st >= step:
        if S % st == 0 and fits(st):
            return st
        st -= step
    return S


def _project_kernel(x_ref, w_ref, o_ref, *, x_contract_dim):
    # x_ref: (E, st) on the fused-(0,2,1) path (contract sublane axis 0), or
    #        (st, E) on the pre-permuted path (contract lane axis 1).
    # w_ref: (E, D)  -- weight pre-transposed in the wrapper (K-major rhs).
    # o_ref: (st, D)
    # Single MXU dot per grid step, f32 accumulation regardless of input dtype.
    y = jax.lax.dot_general(
        x_ref[...],
        w_ref[...],
        dimension_numbers=(((x_contract_dim,), (0,)), ((), ())),
        preferred_element_type=jnp.float32,
    )
    o_ref[...] = y.astype(o_ref.dtype)


def encoder_permute_project(x, weight, permute=(0, 2, 1), *, seq_tile=None,
                            compute_dtype=None):
    """x: (B, E, S) when permute == (0,2,1); weight: (D, E) (PyTorch layout).

    Returns {'projected_encoder_last_hidden_state': (B, S, D)}.
    compute_dtype: e.g. jnp.bfloat16 to halve kernel HBM traffic on v5e/v6e/v7x
    (f32 accumulation kept; ideally the caller already stores x in bf16).
    """
    perm = tuple(permute) if isinstance(permute, (list, tuple)) and permute else None

    D, E = weight.shape

    if compute_dtype is not None and x.dtype != compute_dtype:
        # Narrow dtype in HBM => the (bandwidth-bound) kernel moves half the bytes.
        x = x.astype(compute_dtype)
        weight = weight.astype(compute_dtype)

    if perm == (0, 2, 1):
        # Fused path: x stays (B, E, S) in HBM; the permute becomes the choice
        # of contraction axis inside the kernel (no extra HBM round trip).
        # NOTE: for very small S this block is lane-sparse; if the producer can
        # emit (B, S, E), call with permute=None for the lane-dense path.
        assert x.ndim == 3 and x.shape[1] == E, "expected (B, E, S) input"
        B, _, S = x.shape
        seq_is_lane = True
        x_contract_dim = 0
    else:
        if perm is not None:
            x = jnp.transpose(x, perm)  # uncommon permutations: plain-JAX glue
        assert x.ndim == 3, "kernel supports 3-D (batch, seq, features) inputs"
        # TODO(synk): support other input ranks by flattening leading dims.
        assert x.shape[-1] == E, "last axis after permute must equal in_features"
        B, S, _ = x.shape
        seq_is_lane = False
        x_contract_dim = 1

    dt = x.dtype

    # Weight pre-transposed once to (E, D): K-major rhs, no per-step transpose,
    # no output padding / slice double-handling.
    w_t = jnp.transpose(weight)  # (E, D)

    # Seq tiling: bounds per-step VMEM (padding-aware) and, together with the
    # batch axis, gives >= 2 "parallel" steps (v7x has 2 TensorCores) and >= 2
    # pipeline steps so DMA overlaps the MXU.
    if seq_tile is None:
        st = _choose_seq_tile(S, E, D, dt, seq_is_lane, budget_bytes=24 << 20)
    else:
        st = seq_tile
    if S % st != 0:
        st = S
    n_s = S // st

    if seq_is_lane:
        x_spec = pl.BlockSpec((None, E, st), lambda b, s: (b, 0, s))
    else:
        x_spec = pl.BlockSpec((None, st, E), lambda b, s: (b, s, 0))
    out_spec = pl.BlockSpec((None, st, D), lambda b, s: (b, s, 0))

    itemsize = jnp.dtype(dt).itemsize
    cost = pl.CostEstimate(
        flops=2 * B * S * E * D,
        transcendentals=0,
        bytes_accessed=(x.size * itemsize
                        + w_t.size * jnp.dtype(w_t.dtype).itemsize
                        + B * S * D * itemsize),
    )

    kernel = functools.partial(_project_kernel, x_contract_dim=x_contract_dim)

    def build(w_spec):
        return pl.pallas_call(
            kernel,
            out_shape=jax.ShapeDtypeStruct((B, S, D), dt),
            grid_spec=pltpu.PrefetchScalarGridSpec(
                num_scalar_prefetch=0,
                grid=(B, n_s),
                in_specs=[x_spec, w_spec],
                out_specs=out_spec,
            ),
            compiler_params=pltpu.CompilerParams(
                dimension_semantics=("parallel", "parallel"),
                vmem_limit_bytes=32 * 1024 * 1024,
            ),
            cost_estimate=cost,
        )

    try:
        # Single-buffer the constant weight: its index_map never changes, so the
        # default second pipeline buffer is pure VMEM waste (matters most on
        # v7x's 64 MiB VMEM at production E*D).
        w_spec = pl.BlockSpec((E, D), lambda b, s: (0, 0),
                              pipeline_mode=pl.Buffered(1))
        out = build(w_spec)(x, w_t)
    except Exception:
        # Portability fallback for Pallas versions that reject pipeline_mode on
        # a pallas_call BlockSpec; semantics identical, weight double-buffered.
        w_spec = pl.BlockSpec((E, D), lambda b, s: (0, 0))
        out = build(w_spec)(x, w_t)

    return {"projected_encoder_last_hidden_state": out}


if __name__ == "__main__":
    # Small shapes consistent with the module: batch=2,
    # encoder_last_hidden_state_size=32, spatial positions=16,
    # decoder_hidden_state_size=64.
    B, E, S, D = 2, 32, 16, 64

    key = jax.random.PRNGKey(0)
    kx, kw = jax.random.split(key)

    # Encoder last hidden state, channels-first (B, E, S); permute=(0, 2, 1).
    x = jax.random.normal(kx, (B, E, S), dtype=jnp.float32)
    # Linear weight, PyTorch layout (out_features, in_features).
    weight = jax.random.normal(kw, (D, E), dtype=jnp.float32) * (1.0 / jnp.sqrt(E))

    out = encoder_permute_project(x, weight, permute=(0, 2, 1))
    y = out["projected_encoder_last_hidden_state"]
    jax.block_until_ready(y)

    # Correctness check against plain-JAX reference.
    ref = jnp.einsum("bse,de->bsd", jnp.transpose(x, (0, 2, 1)), weight)
    assert y.shape == (B, S, D)
    assert jnp.allclose(y, ref, atol=1e-5, rtol=1e-5)

    print("KERNEL_OK")
</pallas_src>

<mosaic_0001>
module attributes {stable_mosaic.version = 11 : i64} {
  func.func @_project_kernel(%arg0: i32, %arg1: i32, %arg2: memref<1x32x16xf32, #tpu.memory_space<vmem>>, %arg3: memref<32x64xf32, #tpu.memory_space<vmem>>, %arg4: memref<1x16x64xf32, #tpu.memory_space<vmem>>) attributes {dimension_semantics = [#tpu.dimension_semantics<parallel>, #tpu.dimension_semantics<parallel>], iteration_bounds = array<i64: 2, 1>, scalar_prefetch = 0 : i64, scratch_operands = 0 : i64, tpu.core_type = #tpu.core_type<tc>, window_params = [{transform_indices = @transform_0, window_bounds = array<i64: 1, 32, 16>}, {pipeline_mode = #tpu.pipeline_mode<synchronous>, transform_indices = @transform_1, window_bounds = array<i64: 32, 64>}, {transform_indices = @transform_2, window_bounds = array<i64: 1, 16, 64>}]} {
    %c0 = arith.constant 0 : index
    %c0_0 = arith.constant 0 : index
    %c0_1 = arith.constant 0 : index
    %0 = vector.load %arg2[%c0, %c0_0, %c0_1] : memref<1x32x16xf32, #tpu.memory_space<vmem>>, vector<1x32x16xf32>
    %1 = vector.shape_cast %0 : vector<1x32x16xf32> to vector<32x16xf32>
    %c0_2 = arith.constant 0 : index
    %c0_3 = arith.constant 0 : index
    %2 = vector.load %arg3[%c0_2, %c0_3] : memref<32x64xf32, #tpu.memory_space<vmem>>, vector<32x64xf32>
    %cst = arith.constant dense<0.000000e+00> : vector<16x64xf32>
    %3 = tpu.matmul %1, %2, %cst {dimension_numbers = #tpu.dot_dimension_numbers<[0], [0], [1], [1], [0, 1, 1, 1], [], []>} : vector<32x16xf32>, vector<32x64xf32>, vector<16x64xf32> -> vector<16x64xf32>
    %c0_4 = arith.constant 0 : index
    %c0_5 = arith.constant 0 : index
    %c0_6 = arith.constant 0 : index
    %4 = vector.load %arg4[%c0_4, %c0_5, %c0_6] : memref<1x16x64xf32, #tpu.memory_space<vmem>>, vector<1x16x64xf32>
    %5 = vector.shape_cast %4 : vector<1x16x64xf32> to vector<16x64xf32>
    %6 = vector.shape_cast %3 : vector<16x64xf32> to vector<1x16x64xf32>
    tpu.vector_store %arg4[%c0_4, %c0_5, %c0_6], %6 {strides = array<i32>} : memref<1x16x64xf32, #tpu.memory_space<vmem>>, vector<1x16x64xf32>,
    return
  }
  func.func @transform_0(%arg0: i32, %arg1: i32) -> (i32, i32, i32) {
    %c0_i32 = arith.constant 0 : i32
    %c0_i32_0 = arith.constant 0 : i32
    return %arg0, %c0_i32, %arg1 : i32, i32, i32
  }
  func.func @transform_1(%arg0: i32, %arg1: i32) -> (i32, i32) {
    %c0_i32 = arith.constant 0 : i32
    %c0_i32_0 = arith.constant 0 : i32
    %c0_i32_1 = arith.constant 0 : i32
    return %c0_i32, %c0_i32_0 : i32, i32
  }
  func.func @transform_2(%arg0: i32, %arg1: i32) -> (i32, i32, i32) {
    %c0_i32 = arith.constant 0 : i32
    %c0_i32_0 = arith.constant 0 : i32
    return %arg0, %arg1, %c0_i32 : i32, i32, i32
  }
}

module attributes {stable_mosaic.version = 11 : i64} {
  func.func @_project_kernel(%arg0: i32, %arg1: i32, %arg2: memref<1x32x16xf32, #tpu.memory_space<vmem>>, %arg3: memref<32x64xf32, #tpu.memory_space<vmem>>, %arg4: memref<1x16x64xf32, #tpu.memory_space<vmem>>) attributes {dimension_semantics = [#tpu.dimension_semantics<parallel>, #tpu.dimension_semantics<parallel>], iteration_bounds = array<i64: 2, 1>, scalar_prefetch = 0 : i64, scratch_operands = 0 : i64, tpu.core_type = #tpu.core_type<tc>, window_params = [{transform_indices = @transform_0, window_bounds = array<i64: 1, 32, 16>}, {pipeline_mode = #tpu.pipeline_mode<synchronous>, transform_indices = @transform_1, window_bounds = array<i64: 32, 64>}, {transform_indices = @transform_2, window_bounds = array<i64: 1, 16, 64>}]} {
    %c0 = arith.constant 0 : index
    %c0_0 = arith.constant 0 : index
    %c0_1 = arith.constant 0 : index
    %0 = vector.load %arg2[%c0, %c0_0, %c0_1] : memref<1x32x16xf32, #tpu.memory_space<vmem>>, vector<1x32x16xf32>
    %1 = vector.shape_cast %0 : vector<1x32x16xf32> to vector<32x16xf32>
    %c0_2 = arith.constant 0 : index
    %c0_3 = arith.constant 0 : index
    %2 = vector.load %arg3[%c0_2, %c0_3] : memref<32x64xf32, #tpu.memory_space<vmem>>, vector<32x64xf32>
    %cst = arith.constant dense<0.000000e+00> : vector<16x64xf32>
    %3 = tpu.matmul %1, %2, %cst {dimension_numbers = #tpu.dot_dimension_numbers<[0], [0], [1], [1], [0, 1, 1, 1], [], []>} : vector<32x16xf32>, vector<32x64xf32>, vector<16x64xf32> -> vector<16x64xf32>
    %c0_4 = arith.constant 0 : index
    %c0_5 = arith.constant 0 : index
    %c0_6 = arith.constant 0 : index
    %4 = vector.load %arg4[%c0_4, %c0_5, %c0_6] : memref<1x16x64xf32, #tpu.memory_space<vmem>>, vector<1x16x64xf32>
    %5 = vector.shape_cast %4 : vector<1x16x64xf32> to vector<16x64xf32>
    %6 = vector.shape_cast %3 : vector<16x64xf32> to vector<1x16x64xf32>
    tpu.vector_store %arg4[%c0_4, %c0_5, %c0_6], %6 {strides = array<i32>} : memref<1x16x64xf32, #tpu.memory_space<vmem>>, vector<1x16x64xf32>,
    return
  }
  func.func @transform_0(%arg0: i32, %arg1: i32) -> (i32, i32, i32) {
    %c0_i32 = arith.constant 0 : i32
    %c0_i32_0 = arith.constant 0 : i32
    return %arg0, %c0_i32, %arg1 : i32, i32, i32
  }
  func.func @transform_1(%arg0: i32, %arg1: i32) -> (i32, i32) {
    %c0_i32 = arith.constant 0 : i32
    %c0_i32_0 = arith.constant 0 : i32
    %c0_i32_1 = arith.constant 0 : i32
    return %c0_i32, %c0_i32_0 : i32, i32
  }
  func.func @transform_2(%arg0: i32, %arg1: i32) -> (i32, i32, i32) {
    %c0_i32 = arith.constant 0 : i32
    %c0_i32_0 = arith.constant 0 : i32
    return %arg0, %arg1, %c0_i32 : i32, i32, i32
  }
}

</mosaic_0001>

<llo_original>
// kernel: tpu_custom_call.1
$region0: #{tpu_custom_call.1}
  #allocation0 [shape = 'u32[]', space=smem, size = 0x4, offset = 0x4, fixed_abs, tag = 'smem constant byte address 0x4 - core index']
  #allocation1 [shape = 'u32[144,128]{1,0:T(1,128)}', space=vmem, size = 0x12000, scoped, tag = 'internal scratch']
  %s0 = inlined_call_operand.vmem [shape: f32[2,32,16], index: 0, kind: input, shape index: {}]
  %s1 = inlined_call_operand.vmem [shape: f32[32,64], index: 1, kind: input, shape index: {}]
  %s2 = inlined_call_operand.hbm [shape: f32[2,16,64], index: 2, kind: output, shape index: {}]
  %s3 = sld [smem:[#allocation0]]
  $region41: #{tpu_custom_call.1} parent=0
    _
  %s5 = ssub.s32 1, %s3
  %s6 = scalar_select 0, %s5, %s3
  $region1: #{tpu_custom_call.1} parent=0
    #allocation2 [shape = 'u8[16384]{0}', space=vmem, size = 0x4000, scoped, tag = 'output window, operand 0']
    #allocation3 [shape = 's32[2]{0}', space=sflag, size = 0x8, scoped, tag = 'scoped memory for tpu_custom_call.1']
    %7 = vsyncpa [#allocation3], 0
    %s8 = scalar_lea.sflag [#allocation3], 1
    %9 = vsyncpa %s8, 0
    loop: start=0, step=1, limit=4
    $region2: #{tpu_custom_call.1} parent=1 // loop_pre_header
      _
    $region3: #{tpu_custom_call.1} parent=1 // loop_header
      %s11 = sphi 0, %s15
      %p12 = scmp.ge.s32.totalorder %s11, 4
      %s18 = sphi 0, %s30
      %s19 = sphi 0, %s26
      %s20 = sphi 0, %s18
      %s21 = sphi 0, %s19
      %s22 = sphi 0, %s20
      %s23 = sphi 0, %s21
      %s35 = sphi 0, %s37
      %s38 = sphi 0, %s35
      %s39 = sphi 0, %s38
      %s55 = sphi 0, %s39
      %s59 = sphi 0, %s59
      %s61 = sphi 0, %s59
      %s62 = sphi 0, %s61
      %s76 = sphi 0, %s62
      %s84 = sphi 0, %s86
      %s87 = sphi 0, %s84
      %s88 = sphi 0, %s87
      %s104 = sphi 0, %s88
    $region4: #{tpu_custom_call.1} parent=1 // loop_header_branch
      %14 = sbr.rel (%p12) target = $region8
    $region5: #{tpu_custom_call.1} parent=1 // loop_body
      %s16 = ssub.s32 %s11, 1
      %s17 = ssub.s32 %s11, 2
      %s24 = sadd.s32 1, %s19
      %p25 = scmp.ge.s32.totalorder %s24, 1
      %s26 = scalar_select %p25, 0, %s24
      %s27 = sadd.s32 1, %s18
      %s28 = scalar_select %p25, %s27, %s18
      %p29 = scmp.ge.s32.totalorder %s28, 2
      %s30 = scalar_select %p29, 0, %s28
      %s31 = ssub.s32 %s18, %s30
      %s32 = ssub.s32 %s19, %s26
      %s33 = sor.u32 %s31, %s32
      %p34 = scmp.eq.s32.totalorder %s33, 0
      %s36 = sadd.s32 %s35, 1
      %s37 = scalar_select %p34, %s35, %s36
      %p40 = pneg %p34
      %p41 = scmp.eq.s32.totalorder %s11, 1
      %p42 = por %p40, %p41
      %p43 = scmp.ne.s32.totalorder %s35, %s38
      %p44 = scmp.eq.s32.totalorder %s11, 0
      %p45 = por %p43, %p44
      %p46 = scmp.ne.s32.totalorder %s35, %s38
      %p47 = scmp.eq.s32.totalorder %s16, 1
      %p48 = por %p46, %p47
      %p49 = scmp.ne.s32.totalorder %s38, %s39
      %p50 = scmp.eq.s32.totalorder %s16, 0
      %p51 = por %p49, %p50
      %p52 = scmp.ne.s32.totalorder %s38, %s39
      %p53 = scmp.eq.s32.totalorder %s17, 1
      %p54 = por %p52, %p53
      %p56 = scmp.ne.s32.totalorder %s39, %s55
      %p57 = scmp.eq.s32.totalorder %s17, 0
      %p58 = por %p56, %p57
      %s60 = sadd.s32 %s59, 1
      %p63 = scmp.eq.s32.totalorder %s11, 1
      %p64 = scmp.ne.s32.totalorder %s59, %s61
      %p65 = scmp.eq.s32.totalorder %s11, 0
      %p66 = por %p64, %p65
      %p67 = scmp.ne.s32.totalorder %s59, %s61
      %p68 = scmp.eq.s32.totalorder %s16, 1
      %p69 = por %p67, %p68
      %p70 = scmp.ne.s32.totalorder %s61, %s62
      %p71 = scmp.eq.s32.totalorder %s16, 0
      %p72 = por %p70, %p71
      %p73 = scmp.ne.s32.totalorder %s61, %s62
      %p74 = scmp.eq.s32.totalorder %s17, 1
      %p75 = por %p73, %p74
      %p77 = scmp.ne.s32.totalorder %s62, %s76
      %p78 = scmp.eq.s32.totalorder %s17, 0
      %p79 = por %p77, %p78
      %s80 = ssub.s32 %s18, %s30
      %s81 = ssub.s32 %s19, %s26
      %s82 = sor.u32 %s80, %s81
      %p83 = scmp.eq.s32.totalorder %s82, 0
      %s85 = sadd.s32 %s84, 1
      %s86 = scalar_select %p83, %s84, %s85
      %p89 = pneg %p83
      %p90 = scmp.eq.s32.totalorder %s11, 1
      %p91 = por %p89, %p90
      %p92 = scmp.ne.s32.totalorder %s84, %s87
      %p93 = scmp.eq.s32.totalorder %s11, 0
      %p94 = por %p92, %p93
      %p95 = scmp.ne.s32.totalorder %s84, %s87
      %p96 = scmp.eq.s32.totalorder %s16, 1
      %p97 = por %p95, %p96
      %p98 = scmp.ne.s32.totalorder %s87, %s88
      %p99 = scmp.eq.s32.totalorder %s16, 0
      %p100 = por %p98, %p99
      %p101 = scmp.ne.s32.totalorder %s87, %s88
      %p102 = scmp.eq.s32.totalorder %s17, 1
      %p103 = por %p101, %p102
      %p105 = scmp.ne.s32.totalorder %s88, %s104
      %p106 = scmp.eq.s32.totalorder %s17, 0
      %p107 = por %p105, %p106
      %p108 = scmp.le.s32.totalorder 1, %s11
      %p109 = scmp.lt.s32.totalorder %s11, 3
      %p110 = pnand %p108, %p109
      %p111 = pneg %p110
      // Predicated region
      $region9: #{tpu_custom_call.1} parent=5 // pred_check
        _
      $region10: #{tpu_custom_call.1} parent=5 // pred_check_branch
        %113 = sbr.rel (%p110) target = $region12
      $region11: #{tpu_custom_call.1} parent=5 // pred_region
        %s114 = ssub.s32 %s11, 1
        // Predicated region
        $region13: #{tpu_custom_call.1} parent=11 // pred_check
          %p115 = pneg %p72
        $region14: #{tpu_custom_call.1} parent=11 // pred_check_branch
          %117 = sbr.rel (%p115) target = $region16
        $region15: #{tpu_custom_call.1} parent=11 // pred_region
          _
        $region16: #{tpu_custom_call.1} parent=11 // pred_fallthru
          _
      $region12: #{tpu_custom_call.1} parent=5 // pred_fallthru
        _
      %p118 = scmp.lt.s32.totalorder %s11, 2
      // Predicated region
      $region17: #{tpu_custom_call.1} parent=5 // pred_check
        %p119 = pneg %p118
      $region18: #{tpu_custom_call.1} parent=5 // pred_check_branch
        %121 = sbr.rel (%p119) target = $region20
      $region19: #{tpu_custom_call.1} parent=5 // pred_region
        // Predicated region
        $region21: #{tpu_custom_call.1} parent=19 // pred_check
          %p122 = pneg %p45
        $region22: #{tpu_custom_call.1} parent=19 // pred_check_branch
          %124 = sbr.rel (%p122) target = $region24
        $region23: #{tpu_custom_call.1} parent=19 // pred_region
          %p125 = scmp.lt.s32.totalorder %s18, 1
          %s126 = scalar_select %p125, %s18, 1
          %p127 = scmp.lt.s32.totalorder %s19, 0
          %s128 = scalar_select %p127, %s19, 0
          %s129 = smul.addr %s126, 4
          %s130 = sadd.s32 %s128, %s129
          %s131 = smul.addr %s130, 8
          %s132 = scalar_lea.vmem %s0, %s131
        $region24: #{tpu_custom_call.1} parent=19 // pred_fallthru
          _
      $region20: #{tpu_custom_call.1} parent=5 // pred_fallthru
        _
      %p133 = scmp.le.s32.totalorder 1, %s11
      %p134 = scmp.lt.s32.totalorder %s11, 3
      %p135 = pnand %p133, %p134
      %p136 = pneg %p135
      // Predicated region
      $region25: #{tpu_custom_call.1} parent=5 // pred_check
        _
      $region26: #{tpu_custom_call.1} parent=5 // pred_check_branch
        %138 = sbr.rel (%p135) target = $region28
      $region27: #{tpu_custom_call.1} parent=5 // pred_region
        %s139 = ssub.s32 %s11, 1
        %p140 = scmp.lt.s32.totalorder %s20, 1
        %s141 = scalar_select %p140, %s20, 1
        %p142 = scmp.lt.s32.totalorder %s21, 0
        %s143 = scalar_select %p142, %s21, 0
        %s144 = smul.addr %s141, 4
        %s145 = sadd.s32 %s143, %s144
        %s146 = smul.addr %s145, 8
        %s147 = scalar_lea.vmem %s0, %s146
        %p148 = pneg %p51
        %p149 = pneg %p48
        %p150 = pneg %p72
        %p151 = pneg %p69
        %p152 = pneg %p100
        %p153 = pneg %p97
        %s154 = sand.u32 %s87, 1
        %s155 = scalar_lea.sflag [#allocation3], %s154
        %s156 = sand.u32 %s87, 1
        %s157 = smul.addr %s156, 16
        %s158 = scalar_lea.vmem [#allocation2], %s157
        %p159 = scmp.lt.s32.totalorder %s20, 1
        %s160 = scalar_select %p159, %s20, 1
        %p161 = scmp.lt.s32.totalorder %s21, 0
        %s162 = scalar_select %p161, %s21, 0
        %s163 = smul.addr %s160, 4
        %s164 = sadd.s32 %s162, %s163
        %s165 = smul.addr %s164, 8
        %s166 = scalar_lea.vmem %s0, %s165
        %s167 = smul.u32 2, %s21
        %v168 = vld [vmem:[%s166] sm:$0xff]
        %v169 = vld [vmem:[%s166 + $0x8] sm:$0xff]
        %v170 = vld [vmem:[%s166 + $0x10] sm:$0xff]
        %v171 = vld [vmem:[%s166 + $0x18] sm:$0xff]
        %v172 = vld [vmem:[%s1] sm:$0xff]
        %v173 = vld [vmem:[%s1 + $0x8] sm:$0xff]
        %v174 = vld [vmem:[%s1 + $0x10] sm:$0xff]
        %v175 = vld [vmem:[%s1 + $0x18] sm:$0xff]
        %176 = vxpose.xlu0.b32.start [1/16] %v168, 128
        %177 = vxpose.xlu0.b32.cont [2/16] %v169, 128
        %178 = vxpose.xlu0.b32.cont [3/16] %v170, 128
        %179 = vxpose.xlu0.b32.cont [4/16] %v171, 128
        %180 = vxpose.xlu0.b32.cont [5/16] 0.0, 128
        %181 = vxpose.xlu0.b32.cont [6/16] 0.0, 128
        %182 = vxpose.xlu0.b32.cont [7/16] 0.0, 128
        %183 = vxpose.xlu0.b32.cont [8/16] 0.0, 128
        %184 = vxpose.xlu0.b32.cont [9/16] 0.0, 128
        %185 = vxpose.xlu0.b32.cont [10/16] 0.0, 128
        %186 = vxpose.xlu0.b32.cont [11/16] 0.0, 128
        %187 = vxpose.xlu0.b32.cont [12/16] 0.0, 128
        %188 = vxpose.xlu0.b32.cont [13/16] 0.0, 128
        %189 = vxpose.xlu0.b32.cont [14/16] 0.0, 128
        %190 = vxpose.xlu0.b32.cont [15/16] 0.0, 128
        %191 = vxpose.xlu0.b32.end [16/16] 0.0, 128
        %v192 = vpop.trf.xlu0
        %v193 = vpop.trf.xlu0
        %v194 = vpop.trf.xlu0
        %v195 = vpop.trf.xlu0
        %v196 = vpop.trf.xlu0
        %v197 = vpop.trf.xlu0
        %v198 = vpop.trf.xlu0
        %v199 = vpop.trf.xlu0
        %v200 = vpop.trf.xlu0
        %v201 = vpop.trf.xlu0
        %v202 = vpop.trf.xlu0
        %v203 = vpop.trf.xlu0
        %v204 = vpop.trf.xlu0
        %v205 = vpop.trf.xlu0
        %v206 = vpop.trf.xlu0
        %v207 = vpop.trf.xlu0
        %vm208 = vcmask 261120
        %v210 = vsel %vm208, %v192, 0
        %v213 = vsel %vm208, %v193, 0
        %215 = vmatprep.subr.mxu0 0.0
        %216 = vmatpush1.msra.mxu0 %v172
        %217 = vmatprep.subr.mxu0 0.0
        %218 = vmatpush1.msra.mxu0 %v173
        %219 = vmatprep.subr.mxu0 0.0
        %220 = vmatpush1.msra.mxu0 %v174
        %221 = vmatprep.subr.mxu0 0.0
        %222 = vmatpush1.msra.mxu0 %v175
        %223 = vmatprep.subr.mxu0 0.0
        %224 = vmatpush1.msra.mxu0 0.0
        %225 = vmatprep.subr.mxu0 0.0
        %226 = vmatpush1.msra.mxu0 0.0
        %227 = vmatprep.subr.mxu0 0.0
        %228 = vmatpush1.msra.mxu0 0.0
        %229 = vmatprep.subr.mxu0 0.0
        %230 = vmatpush1.msra.mxu0 0.0
        %231 = vmatprep.subr.mxu0 0.0
        %232 = vmatpush1.msra.mxu0 0.0
        %233 = vmatprep.subr.mxu0 0.0
        %234 = vmatpush1.msra.mxu0 0.0
        %235 = vmatprep.subr.mxu0 0.0
        %236 = vmatpush1.msra.mxu0 0.0
        %237 = vmatprep.subr.mxu0 0.0
        %238 = vmatpush1.msra.mxu0 0.0
        %239 = vmatprep.subr.mxu0 0.0
        %240 = vmatpush1.msra.mxu0 0.0
        %241 = vmatprep.subr.mxu0 0.0
        %242 = vmatpush1.msra.mxu0 0.0
        %243 = vmatprep.subr.mxu0 0.0
        %244 = vmatpush1.msra.mxu0 0.0
        %245 = vmatprep.subr.mxu0 0.0
        %246 = vmatpush1.msra.mxu0 0.0
        %247 = vmatprep.subr.mxu0 0.0
        %248 = vmatpush1.msra.mxu0 0.0
        %249 = vmatprep.subr.mxu0 0.0
        %250 = vmatpush1.msra.mxu0 0.0
        %251 = vmatprep.subr.mxu0 0.0
        %252 = vmatpush1.msra.mxu0 0.0
        %253 = vmatprep.subr.mxu0 0.0
        %254 = vmatpush1.msra.mxu0 0.0
        %255 = vmatprep.subr.mxu0 0.0
        %256 = vmatpush1.msra.mxu0 0.0
        %257 = vmatprep.subr.mxu0 0.0
        %258 = vmatpush1.msra.mxu0 0.0
        %259 = vmatprep.subr.mxu0 0.0
        %260 = vmatpush1.msra.mxu0 0.0
        %261 = vmatprep.subr.mxu0 0.0
        %262 = vmatpush1.msra.mxu0 0.0
        %263 = vmatprep.subr.mxu0 0.0
        %264 = vmatpush1.msra.mxu0 0.0
        %265 = vmatprep.subr.mxu0 0.0
        %266 = vmatpush1.msra.mxu0 0.0
        %267 = vmatprep.subr.mxu0 0.0
        %268 = vmatpush1.msra.mxu0 0.0
        %269 = vmatprep.subr.mxu0 0.0
        %270 = vmatpush1.msra.mxu0 0.0
        %271 = vmatprep.subr.mxu0 0.0
        %272 = vmatpush1.msra.mxu0 0.0
        %273 = vmatprep.subr.mxu0 0.0
        %274 = vmatpush1.msra.mxu0 0.0
        %275 = vmatprep.subr.mxu0 0.0
        %276 = vmatpush1.msra.mxu0 0.0
        %277 = vmatprep.subr.mxu0 0.0
        %278 = vmatpush1.msra.mxu0 0.0
        %279 = vmatprep.mubr.f32.mxu0 0.0
        %280 = vmatmul.mubr.f32.gmra.mrb[0].mxu0 %v210
        %v281 = vpop.f32.mrb[0].mxu0
        %v282 = vadd.f32 0.0, %v281
        %v283 = vpop.f32.mrb[0].mxu0
        %284 = vmatprep.mubr.f32.mxu0 0.0
        %285 = vmatmul.mubr.f32.gmra.mrb[0].mxu0 %v213
        %v286 = vpop.f32.mrb[0].mxu0
        %v287 = vadd.f32 0.0, %v286
        %v288 = vpop.f32.mrb[0].mxu0
        %289 = vdwg.mxu0
        %vm290 = vcmask 523264
        %291 = vst.msk [vmem:[%s158] sm:$0xff] %vm290, %v282
        %292 = vst.msk [vmem:[%s158 + $0x8] sm:$0xff] %vm290, %v287
        %s293 = sand.u32 %s87, 1
        %s294 = scalar_lea.sflag [#allocation3], %s293
        %s295 = sand.u32 %s87, 1
        %s296 = smul.addr %s295, 16
        %s297 = scalar_lea.vmem [#allocation2], %s296
        // Predicated region
        $region29: #{tpu_custom_call.1} parent=27 // pred_check
          %p298 = pneg %p97
        $region30: #{tpu_custom_call.1} parent=27 // pred_check_branch
          %300 = sbr.rel (%p298) target = $region32
        $region31: #{tpu_custom_call.1} parent=27 // pred_region
          %s301 = smul.u32 2, %s21
          %s303 = ssub.s32 256, 256
          %304 = vsyncadd %s294, %s303
          %s305 = smul.addr %s20, 2
          %s306 = sadd.s32 %s301, %s305
          %s307 = smul.addr %s306, 128
          %s308 = scalar_lea.hbm %s2, %s307
          %s309 = sshll.u32 %s297, 4
          %s310 = int_to_ptr.vmem [resolvable:$true] %s309
          %315 = dma.vmem_to_hbm [thread:$0]  %s310, 256, %s308, %s294, 128, 128, 8
        $region32: #{tpu_custom_call.1} parent=27 // pred_fallthru
          _
      $region28: #{tpu_custom_call.1} parent=5 // pred_fallthru
        _
      %p316 = scmp.le.s32.totalorder 2, %s11
      // Predicated region
      $region33: #{tpu_custom_call.1} parent=5 // pred_check
        %p317 = pneg %p316
      $region34: #{tpu_custom_call.1} parent=5 // pred_check_branch
        %319 = sbr.rel (%p317) target = $region36
      $region35: #{tpu_custom_call.1} parent=5 // pred_region
        %s320 = ssub.s32 %s11, 2
        // Predicated region
        $region37: #{tpu_custom_call.1} parent=35 // pred_check
          %p321 = pneg %p103
        $region38: #{tpu_custom_call.1} parent=35 // pred_check_branch
          %323 = sbr.rel (%p321) target = $region40
        $region39: #{tpu_custom_call.1} parent=35 // pred_region
          %s324 = sand.u32 %s88, 1
          %s325 = scalar_lea.sflag [#allocation3], %s324
          %s326 = sand.u32 %s88, 1
          %s327 = smul.addr %s326, 16
          %s328 = scalar_lea.vmem [#allocation2], %s327
          %329 = dma.done %s325, 256
        $region40: #{tpu_custom_call.1} parent=35 // pred_fallthru
          _
      $region36: #{tpu_custom_call.1} parent=5 // pred_fallthru
        _
    $region6: #{tpu_custom_call.1} parent=1 // loop_footer
      %s15 = sadd.s32 1, %s11
    $region7: #{tpu_custom_call.1} parent=1 // loop_footer_branch
      %10 = sbr.rel target = $region3
    $region8: #{tpu_custom_call.1} parent=1 // loop_exit
      _
    %330 = vsyncpa [#allocation3], 1
    %s331 = scalar_lea.sflag [#allocation3], 1
    %332 = vsyncpa %s331, 1

// kernel: tpu_custom_call.1
$region0: #{tpu_custom_call.1}
  #allocation0 [shape = 'u32[]', space=smem, size = 0x4, offset = 0x4, fixed_abs, tag = 'smem constant byte address 0x4 - core index']
  #allocation1 [shape = 'u32[144,128]{1,0:T(1,128)}', space=vmem, size = 0x12000, scoped, tag = 'internal scratch']
  %s0 = inlined_call_operand.vmem [shape: f32[2,32,16], index: 0, kind: input, shape index: {}]
  %s1 = inlined_call_operand.vmem [shape: f32[32,64], index: 1, kind: input, shape index: {}]
  %s2 = inlined_call_operand.hbm [shape: f32[2,16,64], index: 2, kind: output, shape index: {}]
  %s3 = sld [smem:[#allocation0]]
  $region41: #{tpu_custom_call.1} parent=0
    _
  %s5 = ssub.s32 1, %s3
  %s6 = scalar_select 0, %s5, %s3
  $region1: #{tpu_custom_call.1} parent=0
    #allocation2 [shape = 'u8[16384]{0}', space=vmem, size = 0x4000, scoped, tag = 'output window, operand 0']
    #allocation3 [shape = 's32[2]{0}', space=sflag, size = 0x8, scoped, tag = 'scoped memory for tpu_custom_call.1']
    %7 = vsyncpa [#allocation3], 0
    %s8 = scalar_lea.sflag [#allocation3], 1
    %9 = vsyncpa %s8, 0
    loop: start=0, step=1, limit=4
    $region2: #{tpu_custom_call.1} parent=1 // loop_pre_header
      _
    $region3: #{tpu_custom_call.1} parent=1 // loop_header
      %s11 = sphi 0, %s15
      %p12 = scmp.ge.s32.totalorder %s11, 4
      %s18 = sphi 0, %s30
      %s19 = sphi 0, %s26
      %s20 = sphi 0, %s18
      %s21 = sphi 0, %s19
      %s22 = sphi 0, %s20
      %s23 = sphi 0, %s21
      %s35 = sphi 0, %s37
      %s38 = sphi 0, %s35
      %s39 = sphi 0, %s38
      %s55 = sphi 0, %s39
      %s59 = sphi 0, %s59
      %s61 = sphi 0, %s59
      %s62 = sphi 0, %s61
      %s76 = sphi 0, %s62
      %s84 = sphi 0, %s86
      %s87 = sphi 0, %s84
      %s88 = sphi 0, %s87
      %s104 = sphi 0, %s88
    $region4: #{tpu_custom_call.1} parent=1 // loop_header_branch
      %14 = sbr.rel (%p12) target = $region8
    $region5: #{tpu_custom_call.1} parent=1 // loop_body
      %s16 = ssub.s32 %s11, 1
      %s17 = ssub.s32 %s11, 2
      %s24 = sadd.s32 1, %s19
      %p25 = scmp.ge.s32.totalorder %s24, 1
      %s26 = scalar_select %p25, 0, %s24
      %s27 = sadd.s32 1, %s18
      %s28 = scalar_select %p25, %s27, %s18
      %p29 = scmp.ge.s32.totalorder %s28, 2
      %s30 = scalar_select %p29, 0, %s28
      %s31 = ssub.s32 %s18, %s30
      %s32 = ssub.s32 %s19, %s26
      %s33 = sor.u32 %s31, %s32
      %p34 = scmp.eq.s32.totalorder %s33, 0
      %s36 = sadd.s32 %s35, 1
      %s37 = scalar_select %p34, %s35, %s36
      %p40 = pneg %p34
      %p41 = scmp.eq.s32.totalorder %s11, 1
      %p42 = por %p40, %p41
      %p43 = scmp.ne.s32.totalorder %s35, %s38
      %p44 = scmp.eq.s32.totalorder %s11, 0
      %p45 = por %p43, %p44
      %p46 = scmp.ne.s32.totalorder %s35, %s38
      %p47 = scmp.eq.s32.totalorder %s16, 1
      %p48 = por %p46, %p47
      %p49 = scmp.ne.s32.totalorder %s38, %s39
      %p50 = scmp.eq.s32.totalorder %s16, 0
      %p51 = por %p49, %p50
      %p52 = scmp.ne.s32.totalorder %s38, %s39
      %p53 = scmp.eq.s32.totalorder %s17, 1
      %p54 = por %p52, %p53
      %p56 = scmp.ne.s32.totalorder %s39, %s55
      %p57 = scmp.eq.s32.totalorder %s17, 0
      %p58 = por %p56, %p57
      %s60 = sadd.s32 %s59, 1
      %p63 = scmp.eq.s32.totalorder %s11, 1
      %p64 = scmp.ne.s32.totalorder %s59, %s61
      %p65 = scmp.eq.s32.totalorder %s11, 0
      %p66 = por %p64, %p65
      %p67 = scmp.ne.s32.totalorder %s59, %s61
      %p68 = scmp.eq.s32.totalorder %s16, 1
      %p69 = por %p67, %p68
      %p70 = scmp.ne.s32.totalorder %s61, %s62
      %p71 = scmp.eq.s32.totalorder %s16, 0
      %p72 = por %p70, %p71
      %p73 = scmp.ne.s32.totalorder %s61, %s62
      %p74 = scmp.eq.s32.totalorder %s17, 1
      %p75 = por %p73, %p74
      %p77 = scmp.ne.s32.totalorder %s62, %s76
      %p78 = scmp.eq.s32.totalorder %s17, 0
      %p79 = por %p77, %p78
      %s80 = ssub.s32 %s18, %s30
      %s81 = ssub.s32 %s19, %s26
      %s82 = sor.u32 %s80, %s81
      %p83 = scmp.eq.s32.totalorder %s82, 0
      %s85 = sadd.s32 %s84, 1
      %s86 = scalar_select %p83, %s84, %s85
      %p89 = pneg %p83
      %p90 = scmp.eq.s32.totalorder %s11, 1
      %p91 = por %p89, %p90
      %p92 = scmp.ne.s32.totalorder %s84, %s87
      %p93 = scmp.eq.s32.totalorder %s11, 0
      %p94 = por %p92, %p93
      %p95 = scmp.ne.s32.totalorder %s84, %s87
      %p96 = scmp.eq.s32.totalorder %s16, 1
      %p97 = por %p95, %p96
      %p98 = scmp.ne.s32.totalorder %s87, %s88
      %p99 = scmp.eq.s32.totalorder %s16, 0
      %p100 = por %p98, %p99
      %p101 = scmp.ne.s32.totalorder %s87, %s88
      %p102 = scmp.eq.s32.totalorder %s17, 1
      %p103 = por %p101, %p102
      %p105 = scmp.ne.s32.totalorder %s88, %s104
      %p106 = scmp.eq.s32.totalorder %s17, 0
      %p107 = por %p105, %p106
      %p108 = scmp.le.s32.totalorder 1, %s11
      %p109 = scmp.lt.s32.totalorder %s11, 3
      %p110 = pnand %p108, %p109
      %p111 = pneg %p110
      // Predicated region
      $region9: #{tpu_custom_call.1} parent=5 // pred_check
        _
      $region10: #{tpu_custom_call.1} parent=5 // pred_check_branch
        %113 = sbr.rel (%p110) target = $region12
      $region11: #{tpu_custom_call.1} parent=5 // pred_region
        %s114 = ssub.s32 %s11, 1
        // Predicated region
        $region13: #{tpu_custom_call.1} parent=11 // pred_check
          %p115 = pneg %p72
        $region14: #{tpu_custom_call.1} parent=11 // pred_check_branch
          %117 = sbr.rel (%p115) target = $region16
        $region15: #{tpu_custom_call.1} parent=11 // pred_region
          _
        $region16: #{tpu_custom_call.1} parent=11 // pred_fallthru
          _
      $region12: #{tpu_custom_call.1} parent=5 // pred_fallthru
        _
      %p118 = scmp.lt.s32.totalorder %s11, 2
      // Predicated region
      $region17: #{tpu_custom_call.1} parent=5 // pred_check
        %p119 = pneg %p118
      $region18: #{tpu_custom_call.1} parent=5 // pred_check_branch
        %121 = sbr.rel (%p119) target = $region20
      $region19: #{tpu_custom_call.1} parent=5 // pred_region
        // Predicated region
        $region21: #{tpu_custom_call.1} parent=19 // pred_check
          %p122 = pneg %p45
        $region22: #{tpu_custom_call.1} parent=19 // pred_check_branch
          %124 = sbr.rel (%p122) target = $region24
        $region23: #{tpu_custom_call.1} parent=19 // pred_region
          %p125 = scmp.lt.s32.totalorder %s18, 1
          %s126 = scalar_select %p125, %s18, 1
          %p127 = scmp.lt.s32.totalorder %s19, 0
          %s128 = scalar_select %p127, %s19, 0
          %s129 = smul.addr %s126, 4
          %s130 = sadd.s32 %s128, %s129
          %s131 = smul.addr %s130, 8
          %s132 = scalar_lea.vmem %s0, %s131
        $region24: #{tpu_custom_call.1} parent=19 // pred_fallthru
          _
      $region20: #{tpu_custom_call.1} parent=5 // pred_fallthru
        _
      %p133 = scmp.le.s32.totalorder 1, %s11
      %p134 = scmp.lt.s32.totalorder %s11, 3
      %p135 = pnand %p133, %p134
      %p136 = pneg %p135
      // Predicated region
      $region25: #{tpu_custom_call.1} parent=5 // pred_check
        _
      $region26: #{tpu_custom_call.1} parent=5 // pred_check_branch
        %138 = sbr.rel (%p135) target = $region28
      $region27: #{tpu_custom_call.1} parent=5 // pred_region
        %s139 = ssub.s32 %s11, 1
        %p140 = scmp.lt.s32.totalorder %s20, 1
        %s141 = scalar_select %p140, %s20, 1
        %p142 = scmp.lt.s32.totalorder %s21, 0
        %s143 = scalar_select %p142, %s21, 0
        %s144 = smul.addr %s141, 4
        %s145 = sadd.s32 %s143, %s144
        %s146 = smul.addr %s145, 8
        %s147 = scalar_lea.vmem %s0, %s146
        %p148 = pneg %p51
        %p149 = pneg %p48
        %p150 = pneg %p72
        %p151 = pneg %p69
        %p152 = pneg %p100
        %p153 = pneg %p97
        %s154 = sand.u32 %s87, 1
        %s155 = scalar_lea.sflag [#allocation3], %s154
        %s156 = sand.u32 %s87, 1
        %s157 = smul.addr %s156, 16
        %s158 = scalar_lea.vmem [#allocation2], %s157
        %p159 = scmp.lt.s32.totalorder %s20, 1
        %s160 = scalar_select %p159, %s20, 1
        %p161 = scmp.lt.s32.totalorder %s21, 0
        %s162 = scalar_select %p161, %s21, 0
        %s163 = smul.addr %s160, 4
        %s164 = sadd.s32 %s162, %s163
        %s165 = smul.addr %s164, 8
        %s166 = scalar_lea.vmem %s0, %s165
        %s167 = smul.u32 2, %s21
        %v168 = vld [vmem:[%s166] sm:$0xff]
        %v169 = vld [vmem:[%s166 + $0x8] sm:$0xff]
        %v170 = vld [vmem:[%s166 + $0x10] sm:$0xff]
        %v171 = vld [vmem:[%s166 + $0x18] sm:$0xff]
        %v172 = vld [vmem:[%s1] sm:$0xff]
        %v173 = vld [vmem:[%s1 + $0x8] sm:$0xff]
        %v174 = vld [vmem:[%s1 + $0x10] sm:$0xff]
        %v175 = vld [vmem:[%s1 + $0x18] sm:$0xff]
        %176 = vxpose.xlu0.b32.start [1/16] %v168, 128
        %177 = vxpose.xlu0.b32.cont [2/16] %v169, 128
        %178 = vxpose.xlu0.b32.cont [3/16] %v170, 128
        %179 = vxpose.xlu0.b32.cont [4/16] %v171, 128
        %180 = vxpose.xlu0.b32.cont [5/16] 0.0, 128
        %181 = vxpose.xlu0.b32.cont [6/16] 0.0, 128
        %182 = vxpose.xlu0.b32.cont [7/16] 0.0, 128
        %183 = vxpose.xlu0.b32.cont [8/16] 0.0, 128
        %184 = vxpose.xlu0.b32.cont [9/16] 0.0, 128
        %185 = vxpose.xlu0.b32.cont [10/16] 0.0, 128
        %186 = vxpose.xlu0.b32.cont [11/16] 0.0, 128
        %187 = vxpose.xlu0.b32.cont [12/16] 0.0, 128
        %188 = vxpose.xlu0.b32.cont [13/16] 0.0, 128
        %189 = vxpose.xlu0.b32.cont [14/16] 0.0, 128
        %190 = vxpose.xlu0.b32.cont [15/16] 0.0, 128
        %191 = vxpose.xlu0.b32.end [16/16] 0.0, 128
        %v192 = vpop.trf.xlu0
        %v193 = vpop.trf.xlu0
        %v194 = vpop.trf.xlu0
        %v195 = vpop.trf.xlu0
        %v196 = vpop.trf.xlu0
        %v197 = vpop.trf.xlu0
        %v198 = vpop.trf.xlu0
        %v199 = vpop.trf.xlu0
        %v200 = vpop.trf.xlu0
        %v201 = vpop.trf.xlu0
        %v202 = vpop.trf.xlu0
        %v203 = vpop.trf.xlu0
        %v204 = vpop.trf.xlu0
        %v205 = vpop.trf.xlu0
        %v206 = vpop.trf.xlu0
        %v207 = vpop.trf.xlu0
        %vm208 = vcmask 261120
        %v210 = vsel %vm208, %v192, 0
        %v213 = vsel %vm208, %v193, 0
        %215 = vmatprep.subr.mxu0 0.0
        %216 = vmatpush1.msra.mxu0 %v172
        %217 = vmatprep.subr.mxu0 0.0
        %218 = vmatpush1.msra.mxu0 %v173
        %219 = vmatprep.subr.mxu0 0.0
        %220 = vmatpush1.msra.mxu0 %v174
        %221 = vmatprep.subr.mxu0 0.0
        %222 = vmatpush1.msra.mxu0 %v175
        %223 = vmatprep.subr.mxu0 0.0
        %224 = vmatpush1.msra.mxu0 0.0
        %225 = vmatprep.subr.mxu0 0.0
        %226 = vmatpush1.msra.mxu0 0.0
        %227 = vmatprep.subr.mxu0 0.0
        %228 = vmatpush1.msra.mxu0 0.0
        %229 = vmatprep.subr.mxu0 0.0
        %230 = vmatpush1.msra.mxu0 0.0
        %231 = vmatprep.subr.mxu0 0.0
        %232 = vmatpush1.msra.mxu0 0.0
        %233 = vmatprep.subr.mxu0 0.0
        %234 = vmatpush1.msra.mxu0 0.0
        %235 = vmatprep.subr.mxu0 0.0
        %236 = vmatpush1.msra.mxu0 0.0
        %237 = vmatprep.subr.mxu0 0.0
        %238 = vmatpush1.msra.mxu0 0.0
        %239 = vmatprep.subr.mxu0 0.0
        %240 = vmatpush1.msra.mxu0 0.0
        %241 = vmatprep.subr.mxu0 0.0
        %242 = vmatpush1.msra.mxu0 0.0
        %243 = vmatprep.subr.mxu0 0.0
        %244 = vmatpush1.msra.mxu0 0.0
        %245 = vmatprep.subr.mxu0 0.0
        %246 = vmatpush1.msra.mxu0 0.0
        %247 = vmatprep.subr.mxu0 0.0
        %248 = vmatpush1.msra.mxu0 0.0
        %249 = vmatprep.subr.mxu0 0.0
        %250 = vmatpush1.msra.mxu0 0.0
        %251 = vmatprep.subr.mxu0 0.0
        %252 = vmatpush1.msra.mxu0 0.0
        %253 = vmatprep.subr.mxu0 0.0
        %254 = vmatpush1.msra.mxu0 0.0
        %255 = vmatprep.subr.mxu0 0.0
        %256 = vmatpush1.msra.mxu0 0.0
        %257 = vmatprep.subr.mxu0 0.0
        %258 = vmatpush1.msra.mxu0 0.0
        %259 = vmatprep.subr.mxu0 0.0
        %260 = vmatpush1.msra.mxu0 0.0
        %261 = vmatprep.subr.mxu0 0.0
        %262 = vmatpush1.msra.mxu0 0.0
        %263 = vmatprep.subr.mxu0 0.0
        %264 = vmatpush1.msra.mxu0 0.0
        %265 = vmatprep.subr.mxu0 0.0
        %266 = vmatpush1.msra.mxu0 0.0
        %267 = vmatprep.subr.mxu0 0.0
        %268 = vmatpush1.msra.mxu0 0.0
        %269 = vmatprep.subr.mxu0 0.0
        %270 = vmatpush1.msra.mxu0 0.0
        %271 = vmatprep.subr.mxu0 0.0
        %272 = vmatpush1.msra.mxu0 0.0
        %273 = vmatprep.subr.mxu0 0.0
        %274 = vmatpush1.msra.mxu0 0.0
        %275 = vmatprep.subr.mxu0 0.0
        %276 = vmatpush1.msra.mxu0 0.0
        %277 = vmatprep.subr.mxu0 0.0
        %278 = vmatpush1.msra.mxu0 0.0
        %279 = vmatprep.mubr.f32.mxu0 0.0
        %280 = vmatmul.mubr.f32.gmra.mrb[0].mxu0 %v210
        %v281 = vpop.f32.mrb[0].mxu0
        %v282 = vadd.f32 0.0, %v281
        %v283 = vpop.f32.mrb[0].mxu0
        %284 = vmatprep.mubr.f32.mxu0 0.0
        %285 = vmatmul.mubr.f32.gmra.mrb[0].mxu0 %v213
        %v286 = vpop.f32.mrb[0].mxu0
        %v287 = vadd.f32 0.0, %v286
        %v288 = vpop.f32.mrb[0].mxu0
        %289 = vdwg.mxu0
        %vm290 = vcmask 523264
        %291 = vst.msk [vmem:[%s158] sm:$0xff] %vm290, %v282
        %292 = vst.msk [vmem:[%s158 + $0x8] sm:$0xff] %vm290, %v287
        %s293 = sand.u32 %s87, 1
        %s294 = scalar_lea.sflag [#allocation3], %s293
        %s295 = sand.u32 %s87, 1
        %s296 = smul.addr %s295, 16
        %s297 = scalar_lea.vmem [#allocation2], %s296
        // Predicated region
        $region29: #{tpu_custom_call.1} parent=27 // pred_check
          %p298 = pneg %p97
        $region30: #{tpu_custom_call.1} parent=27 // pred_check_branch
          %300 = sbr.rel (%p298) target = $region32
        $region31: #{tpu_custom_call.1} parent=27 // pred_region
          %s301 = smul.u32 2, %s21
          %s303 = ssub.s32 256, 256
          %304 = vsyncadd %s294, %s303
          %s305 = smul.addr %s20, 2
          %s306 = sadd.s32 %s301, %s305
          %s307 = smul.addr %s306, 128
          %s308 = scalar_lea.hbm %s2, %s307
          %s309 = sshll.u32 %s297, 4
          %s310 = int_to_ptr.vmem [resolvable:$true] %s309
          %315 = dma.vmem_to_hbm [thread:$0]  %s310, 256, %s308, %s294, 128, 128, 8
        $region32: #{tpu_custom_call.1} parent=27 // pred_fallthru
          _
      $region28: #{tpu_custom_call.1} parent=5 // pred_fallthru
        _
      %p316 = scmp.le.s32.totalorder 2, %s11
      // Predicated region
      $region33: #{tpu_custom_call.1} parent=5 // pred_check
        %p317 = pneg %p316
      $region34: #{tpu_custom_call.1} parent=5 // pred_check_branch
        %319 = sbr.rel (%p317) target = $region36
      $region35: #{tpu_custom_call.1} parent=5 // pred_region
        %s320 = ssub.s32 %s11, 2
        // Predicated region
        $region37: #{tpu_custom_call.1} parent=35 // pred_check
          %p321 = pneg %p103
        $region38: #{tpu_custom_call.1} parent=35 // pred_check_branch
          %323 = sbr.rel (%p321) target = $region40
        $region39: #{tpu_custom_call.1} parent=35 // pred_region
          %s324 = sand.u32 %s88, 1
          %s325 = scalar_lea.sflag [#allocation3], %s324
          %s326 = sand.u32 %s88, 1
          %s327 = smul.addr %s326, 16
          %s328 = scalar_lea.vmem [#allocation2], %s327
          %329 = dma.done %s325, 256
        $region40: #{tpu_custom_call.1} parent=35 // pred_fallthru
          _
      $region36: #{tpu_custom_call.1} parent=5 // pred_fallthru
        _
    $region6: #{tpu_custom_call.1} parent=1 // loop_footer
      %s15 = sadd.s32 1, %s11
    $region7: #{tpu_custom_call.1} parent=1 // loop_footer_branch
      %10 = sbr.rel target = $region3
    $region8: #{tpu_custom_call.1} parent=1 // loop_exit
      _
    %330 = vsyncpa [#allocation3], 1
    %s331 = scalar_lea.sflag [#allocation3], 1
    %332 = vsyncpa %s331, 1

</llo_original>
